<compile_context>
chip_gen: v5e
topology: v5e:2x2
jax: 0.10.0
libtpu: 0.0.40
codegen_flags: <defaults>
</compile_context>

<pallas_src>
import jax
import jax.numpy as jnp
from jax.experimental import pallas as pl
from jax.experimental.pallas import tpu as pltpu

IGNORE_INDEX = -100


# ---------------------------------------------------------------------------
# Tile selection (tm-first, VMEM-budgeted, generation-aware)
# ---------------------------------------------------------------------------
def _round_up(n, m):
    return ((n + m - 1) // m) * m


def _tv_candidates(V):
    """Vocab-tile candidates in preference order: exact 256-aligned divisors
    of V (no weight padding, full-width v6e/v7x MXU), then exact 128-aligned
    divisors, then padded 256-multiples as a last resort."""
    cands, seen = [], set()

    def add(tv):
        if tv >= 128 and tv not in seen:
            seen.add(tv)
            cands.append(tv)

    for align in (256, 128):
        for d in sorted((d for d in range(align, min(V, 1536) + 1, align)
                         if V % d == 0), reverse=True):
            add(d)
    v_cap = _round_up(V, 128)
    for t in (1024, 512, 256, 128):
        if t <= v_cap:
            add(t)
    if not cands:
        add(v_cap)
    return cands


def _choose_tiles(M, H, V, itemsize):
    """Pick (tm, tv, tk, vmem_limit_bytes).

    tm gets the VMEM budget first (weight re-stream traffic ~ (M/tm)*V*H);
    tk (the hidden/contraction tile) shrinks so that a large tm still fits
    small-VMEM parts (v7x: 64 MiB per TensorCore)."""
    vmem_cap = 64 << 20                       # conservative default (v7x)
    try:
        vmem_cap = int(pltpu.get_tpu_info().vmem_capacity_bytes)
    except Exception:
        pass
    # 128 MiB parts (v5e/v6e) are compute-bound at these tiles: spend more
    # VMEM. 64 MiB parts (v7x) keep pipeline/compiler headroom.
    frac = 0.78 if vmem_cap >= (100 << 20) else 0.55
    budget = int(vmem_cap * frac)

    narrow = 3584       # bytes/row: (tm,1) tgt/loss/m/l/p buffers pad to 128 lanes
    slack = 2 << 20

    # tm: 16-aligned (bf16 sublane packing); capped near M/2 so the "parallel"
    # i axis splits across two TensorCores when M is big enough (v7x).
    m_cap = _round_up(M, 16)
    if M >= 1024:
        m_cap = min(m_cap, _round_up((M + 1) // 2, 16))
    tm_ladder = (4096, 2048, 1024, 512, 256, 128, 64, 32, 16)
    tm_cands = sorted({min(t, m_cap) for t in tm_ladder}, reverse=True)

    tv_cands = _tv_candidates(V)

    def ws_bytes(tm, tv, tk):
        return (2 * itemsize * tm * tk        # x tile, double-buffered
                + 2 * itemsize * tv * tk      # w tile, double-buffered
                + 2 * itemsize * tm * tv      # logits out tile, double-buffered
                + 4 * tm * tv                 # f32 accumulator scratch
                + narrow * tm                 # (tm,1) int32/f32 side buffers
                + slack)

    def shrink_tk(tm, tv):
        tk = H
        # Only halve while the result stays a 128-multiple (layout rule).
        while ws_bytes(tm, tv, tk) > budget and tk % 256 == 0 and tk >= 512:
            tk //= 2
        return tk

    choice = None
    for tm in tm_cands:
        for tv in tv_cands:
            tk = shrink_tk(tm, tv)
            if ws_bytes(tm, tv, tk) <= budget:
                choice = (tm, tv, tk)
                break
        if choice is not None:
            break
    if choice is None:                        # pathological: smallest combo
        tm, tv = tm_cands[-1], tv_cands[-1]
        choice = (tm, tv, shrink_tk(tm, tv))

    tm, tv, tk = choice
    need = ws_bytes(tm, tv, tk)
    vmem_limit = int(min(vmem_cap - (2 << 20), max(need + (16 << 20), 32 << 20)))
    return tm, tv, tk, vmem_limit


# ---------------------------------------------------------------------------
# Fused lm_head matmul + online-logsumexp cross-entropy
#   grid = (Mp//tm, Vp//tv, H//tk); i parallel, j (vocab) & k (hidden) reductions
# ---------------------------------------------------------------------------
def _make_fused_kernel(tv, v_real, v_padded, with_logits):
    def kernel(x_ref, w_ref, tgt_ref, *rest):
        if with_logits:
            o_ref, loss_ref, acc_scr, m_scr, l_scr, p_scr = rest
        else:
            loss_ref, acc_scr, m_scr, l_scr, p_scr = rest

        j = pl.program_id(1)
        k = pl.program_id(2)
        nj = pl.num_programs(1)
        nk = pl.num_programs(2)

        @pl.when(k == 0)
        def _():
            acc_scr[...] = jnp.zeros_like(acc_scr)

        # x_ref: (tm, tk) ; w_ref: (tv, tk) in the weight's native [V, H]
        # layout. Contract H (dim 1 of both) on the MXU; accumulate in f32.
        acc_scr[...] += jax.lax.dot_general(
            x_ref[...], w_ref[...], (((1,), (1,)), ((), ())),
            preferred_element_type=jnp.float32)

        @pl.when(k == nk - 1)
        def _():
            acc = acc_scr[...]                                 # (tm, tv) f32
            if with_logits:
                o_ref[...] = acc.astype(o_ref.dtype)

            @pl.when(j == 0)
            def _():
                m_scr[...] = jnp.full_like(m_scr, -jnp.inf)
                l_scr[...] = jnp.zeros_like(l_scr)
                p_scr[...] = jnp.zeros_like(p_scr)

            tgt = tgt_ref[...]                                 # (tm, 1) int32
            col = jax.lax.broadcasted_iota(jnp.int32, acc.shape, 1) + j * tv
            if v_padded:
                # Padded vocab columns must not contribute to the logsumexp.
                acc_lse = jnp.where(col < v_real, acc, -jnp.inf)
            else:
                acc_lse = acc

            # Online logsumexp update (f32 throughout; exp on the EUP).
            tile_max = jnp.max(acc_lse, axis=-1, keepdims=True)
            m_new = jnp.maximum(m_scr[...], tile_max)
            alpha = jnp.exp(m_scr[...] - m_new)
            l_scr[...] = alpha * l_scr[...] + jnp.sum(
                jnp.exp(acc_lse - m_new), axis=-1, keepdims=True)
            m_scr[...] = m_new
            # Exactly one column over the whole vocab sweep matches tgt
            # (IGNORE_INDEX < 0 and padded cols >= v_real never match).
            p_scr[...] = p_scr[...] + jnp.sum(
                jnp.where(col == tgt, acc, 0.0), axis=-1, keepdims=True)

            @pl.when(j == nj - 1)
            def _():
                lse = m_scr[...] + jnp.log(l_scr[...])
                valid = tgt != IGNORE_INDEX
                loss_ref[...] = jnp.where(valid, lse - p_scr[...], 0.0)

    return kernel


def _run_fused(x_flat, w, tgt, *, with_logits):
    """x_flat: [M, H], w: [V, H], tgt: [M, 1] int32.
    Returns (logits[M, V], loss_rows[M, 1]) or loss_rows[M, 1]."""
    M, H = x_flat.shape
    V = w.shape[0]
    itemsize = max(jnp.dtype(x_flat.dtype).itemsize, jnp.dtype(w.dtype).itemsize)
    tm, tv, tk, vmem_limit = _choose_tiles(M, H, V, itemsize)

    Mp = _round_up(M, tm)
    Vp = _round_up(V, tv)
    if Mp != M:
        x_flat = jnp.pad(x_flat, ((0, Mp - M), (0, 0)))
        tgt = jnp.pad(tgt, ((0, Mp - M), (0, 0)), constant_values=IGNORE_INDEX)
    if Vp != V:
        w = jnp.pad(w, ((0, Vp - V), (0, 0)))

    kernel = _make_fused_kernel(tv, V, Vp != V, with_logits)

    loss_shape = jax.ShapeDtypeStruct((Mp, 1), jnp.float32)
    loss_spec = pl.BlockSpec((tm, 1), lambda i, j, k: (i, 0))
    if with_logits:
        out_shape = (jax.ShapeDtypeStruct((Mp, Vp), x_flat.dtype), loss_shape)
        out_specs = [pl.BlockSpec((tm, tv), lambda i, j, k: (i, j)), loss_spec]
    else:
        out_shape = loss_shape
        out_specs = loss_spec

    res = pl.pallas_call(
        kernel,
        out_shape=out_shape,
        grid_spec=pltpu.PrefetchScalarGridSpec(
            num_scalar_prefetch=0,
            grid=(Mp // tm, Vp // tv, H // tk),
            in_specs=[
                pl.BlockSpec((tm, tk), lambda i, j, k: (i, k)),   # activations
                pl.BlockSpec((tv, tk), lambda i, j, k: (j, k)),   # weight [V,H]
                pl.BlockSpec((tm, 1), lambda i, j, k: (i, 0)),    # shifted targets
            ],
            out_specs=out_specs,
            scratch_shapes=[
                pltpu.VMEM((tm, tv), jnp.float32),   # f32 matmul accumulator
                pltpu.VMEM((tm, 1), jnp.float32),    # running max
                pltpu.VMEM((tm, 1), jnp.float32),    # running sum(exp)
                pltpu.VMEM((tm, 1), jnp.float32),    # picked target logit
            ],
        ),
        compiler_params=pltpu.CompilerParams(
            dimension_semantics=("parallel", "arbitrary", "arbitrary"),
            vmem_limit_bytes=vmem_limit,
        ),
    )(x_flat, w, tgt)

    if with_logits:
        logits_p, loss_rows = res
        return logits_p[:M, :V], loss_rows[:M]
    return res[:M]


# ---------------------------------------------------------------------------
# Logits-only path (labels=None)
# ---------------------------------------------------------------------------
def _logits_kernel(x_ref, w_ref, o_ref, acc_scr):
    k = pl.program_id(2)
    nk = pl.num_programs(2)

    @pl.when(k == 0)
    def _():
        acc_scr[...] = jnp.zeros_like(acc_scr)

    acc_scr[...] += jax.lax.dot_general(
        x_ref[...], w_ref[...], (((1,), (1,)), ((), ())),
        preferred_element_type=jnp.float32)

    @pl.when(k == nk - 1)
    def _():
        o_ref[...] = acc_scr[...].astype(o_ref.dtype)


def lm_head_logits(x_flat, w):
    M, H = x_flat.shape
    V = w.shape[0]
    itemsize = max(jnp.dtype(x_flat.dtype).itemsize, jnp.dtype(w.dtype).itemsize)
    tm, tv, tk, vmem_limit = _choose_tiles(M, H, V, itemsize)

    Mp = _round_up(M, tm)
    Vp = _round_up(V, tv)
    if Mp != M:
        x_flat = jnp.pad(x_flat, ((0, Mp - M), (0, 0)))
    if Vp != V:
        w = jnp.pad(w, ((0, Vp - V), (0, 0)))

    out = pl.pallas_call(
        _logits_kernel,
        out_shape=jax.ShapeDtypeStruct((Mp, Vp), x_flat.dtype),
        grid_spec=pltpu.PrefetchScalarGridSpec(
            num_scalar_prefetch=0,
            grid=(Mp // tm, Vp // tv, H // tk),
            in_specs=[
                pl.BlockSpec((tm, tk), lambda i, j, k: (i, k)),
                pl.BlockSpec((tv, tk), lambda i, j, k: (j, k)),
            ],
            out_specs=pl.BlockSpec((tm, tv), lambda i, j, k: (i, j)),
            scratch_shapes=[pltpu.VMEM((tm, tv), jnp.float32)],
        ),
        compiler_params=pltpu.CompilerParams(
            dimension_semantics=("parallel", "parallel", "arbitrary"),
            vmem_limit_bytes=vmem_limit,
        ),
    )(x_flat, w)
    return out[:M, :V]


# ---------------------------------------------------------------------------
# Module wrappers (mirror LlamaHead.forward)
# ---------------------------------------------------------------------------
def _shift_targets(labels, B, M):
    # Shift the labels instead of the logits: row (b, s) predicts
    # labels[b, s+1]; the last position of each sequence is ignored. This is
    # exactly CrossEntropyLoss(shift_logits, shift_labels) with ignore_index.
    shifted = jnp.concatenate(
        [labels[:, 1:], jnp.full((B, 1), IGNORE_INDEX, dtype=labels.dtype)],
        axis=1)
    return shifted.reshape(M, 1).astype(jnp.int32)


@jax.jit
def llama_head_forward(hidden_states, lm_head_weight, labels=None):
    """hidden_states: [B, S, H] bf16, lm_head_weight: [V, H] bf16,
    labels: [B, S] int or None. Returns (loss, logits[B, S, V])."""
    B, S, H = hidden_states.shape
    V = lm_head_weight.shape[0]
    M = B * S
    x_flat = hidden_states.reshape(M, H)

    if labels is None:
        logits = lm_head_logits(x_flat, lm_head_weight).reshape(B, S, V)
        return None, logits

    tgt = _shift_targets(labels, B, M)
    logits_flat, loss_rows = _run_fused(x_flat, lm_head_weight, tgt,
                                        with_logits=True)
    count = jnp.sum((tgt != IGNORE_INDEX).astype(jnp.float32))
    # NOTE: if every label is IGNORE_INDEX this is 0/0 = NaN, matching
    # torch.nn.CrossEntropyLoss behavior.
    loss = (jnp.sum(loss_rows) / count).astype(jnp.float32)
    return loss, logits_flat.reshape(B, S, V)


@jax.jit
def llama_head_loss_only(hidden_states, lm_head_weight, labels):
    """Loss-only fast path: skips the (M, V) logits HBM writeback entirely."""
    B, S, H = hidden_states.shape
    M = B * S
    x_flat = hidden_states.reshape(M, H)
    tgt = _shift_targets(labels, B, M)
    loss_rows = _run_fused(x_flat, lm_head_weight, tgt, with_logits=False)
    count = jnp.sum((tgt != IGNORE_INDEX).astype(jnp.float32))
    return (jnp.sum(loss_rows) / count).astype(jnp.float32)


if __name__ == "__main__":
    # Small synthetic config consistent with the module's forward:
    #   B=2, S=8, hidden H=128, vocab V=256
    B, S, H, V = 2, 8, 128, 256

    key = jax.random.PRNGKey(0)
    k_x, k_w, k_l = jax.random.split(key, 3)

    hidden_states = (jax.random.normal(k_x, (B, S, H), jnp.float32) * 0.5
                     ).astype(jnp.bfloat16)
    lm_head_weight = (jax.random.normal(k_w, (V, H), jnp.float32) * 0.02
                      ).astype(jnp.bfloat16)
    labels = jax.random.randint(k_l, (B, S), 0, V, dtype=jnp.int32)
    # Sprinkle in an ignored position to exercise ignore_index=-100.
    labels = labels.at[0, 3].set(IGNORE_INDEX)

    loss, logits = llama_head_forward(hidden_states, lm_head_weight, labels)
    none_loss, logits_only = llama_head_forward(hidden_states, lm_head_weight)
    loss_no_logits = llama_head_loss_only(hidden_states, lm_head_weight, labels)
    jax.block_until_ready((loss, logits, logits_only, loss_no_logits))

    # Reference check in plain JAX (fp32) for sanity.
    ref_logits = jnp.dot(hidden_states.astype(jnp.float32),
                         lm_head_weight.T.astype(jnp.float32))
    sl = ref_logits[:, :-1, :].reshape(-1, V)
    sb = labels[:, 1:].reshape(-1)
    valid = sb != IGNORE_INDEX
    lse = jax.nn.logsumexp(sl, axis=-1)
    picked = jnp.take_along_axis(sl, jnp.clip(sb, 0, V - 1)[:, None], axis=-1)[:, 0]
    ref_loss = jnp.sum(jnp.where(valid, lse - picked, 0.0)) / jnp.sum(valid)

    assert none_loss is None
    assert logits.shape == (B, S, V) and logits.dtype == jnp.bfloat16
    assert jnp.allclose(logits.astype(jnp.float32), ref_logits, rtol=2e-2, atol=2e-2)
    assert jnp.allclose(logits_only.astype(jnp.float32), ref_logits, rtol=2e-2, atol=2e-2)
    assert jnp.allclose(loss, ref_loss, rtol=2e-2, atol=2e-2)
    assert jnp.allclose(loss_no_logits, ref_loss, rtol=2e-2, atol=2e-2)

    print("KERNEL_OK")
</pallas_src>

<mosaic_0001>
module attributes {stable_mosaic.version = 11 : i64} {
  func.func @kernel(%arg0: i32, %arg1: i32, %arg2: i32, %arg3: memref<16x128xbf16, #tpu.memory_space<vmem>>, %arg4: memref<256x128xbf16, #tpu.memory_space<vmem>>, %arg5: memref<16x1xi32, #tpu.memory_space<vmem>>, %arg6: memref<16x256xbf16, #tpu.memory_space<vmem>>, %arg7: memref<16x1xf32, #tpu.memory_space<vmem>>, %arg8: memref<16x256xf32, #tpu.memory_space<vmem>>, %arg9: memref<16x1xf32, #tpu.memory_space<vmem>>, %arg10: memref<16x1xf32, #tpu.memory_space<vmem>>, %arg11: memref<16x1xf32, #tpu.memory_space<vmem>>) attributes {dimension_semantics = [#tpu.dimension_semantics<parallel>, #tpu.dimension_semantics<arbitrary>, #tpu.dimension_semantics<arbitrary>], iteration_bounds = array<i64: 1, 1, 1>, scalar_prefetch = 0 : i64, scratch_operands = 4 : i64, tpu.core_type = #tpu.core_type<tc>, window_params = [{transform_indices = @transform_0, window_bounds = array<i64: 16, 128>}, {transform_indices = @transform_1, window_bounds = array<i64: 256, 128>}, {transform_indices = @transform_2, window_bounds = array<i64: 16, 1>}, {transform_indices = @transform_3, window_bounds = array<i64: 16, 256>}, {transform_indices = @transform_4, window_bounds = array<i64: 16, 1>}]} {
    %c0_i32 = arith.constant 0 : i32
    %0 = arith.cmpi eq, %arg2, %c0_i32 : i32
    %1 = arith.extui %0 : i1 to i32
    %c0_i32_0 = arith.constant 0 : i32
    %2 = arith.cmpi ne, %1, %c0_i32_0 : i32
    scf.if %2 {
      %cst_10 = arith.constant 0.000000e+00 : f32
      %12 = vector.broadcast %cst_10 : f32 to vector<16x256xf32>
      %c0_11 = arith.constant 0 : index
      %c0_12 = arith.constant 0 : index
      %13 = vector.load %arg8[%c0_11, %c0_12] : memref<16x256xf32, #tpu.memory_space<vmem>>, vector<16x256xf32>
      tpu.vector_store %arg8[%c0_11, %c0_12], %12 {strides = array<i32>} : memref<16x256xf32, #tpu.memory_space<vmem>>, vector<16x256xf32>,
    } else {
    }
    %c0 = arith.constant 0 : index
    %c0_1 = arith.constant 0 : index
    %3 = vector.load %arg8[%c0, %c0_1] : memref<16x256xf32, #tpu.memory_space<vmem>>, vector<16x256xf32>
    %c0_2 = arith.constant 0 : index
    %c0_3 = arith.constant 0 : index
    %4 = vector.load %arg3[%c0_2, %c0_3] : memref<16x128xbf16, #tpu.memory_space<vmem>>, vector<16x128xbf16>
    %c0_4 = arith.constant 0 : index
    %c0_5 = arith.constant 0 : index
    %5 = vector.load %arg4[%c0_4, %c0_5] : memref<256x128xbf16, #tpu.memory_space<vmem>>, vector<256x128xbf16>
    %cst = arith.constant dense<0.000000e+00> : vector<16x256xf32>
    %6 = tpu.matmul %4, %5, %cst {dimension_numbers = #tpu.dot_dimension_numbers<[1], [1], [0], [0], [0, 0, 1, 0], [], []>} : vector<16x128xbf16>, vector<256x128xbf16>, vector<16x256xf32> -> vector<16x256xf32>
    %7 = arith.addf %3, %6 : vector<16x256xf32>
    %c0_6 = arith.constant 0 : index
    %c0_7 = arith.constant 0 : index
    %8 = vector.load %arg8[%c0_6, %c0_7] : memref<16x256xf32, #tpu.memory_space<vmem>>, vector<16x256xf32>
    tpu.vector_store %arg8[%c0_6, %c0_7], %7 {strides = array<i32>} : memref<16x256xf32, #tpu.memory_space<vmem>>, vector<16x256xf32>,
    %c0_i32_8 = arith.constant 0 : i32
    %9 = arith.cmpi eq, %arg2, %c0_i32_8 : i32
    %10 = arith.extui %9 : i1 to i32
    %c0_i32_9 = arith.constant 0 : i32
    %11 = arith.cmpi ne, %10, %c0_i32_9 : i32
    scf.if %11 {
      %c0_10 = arith.constant 0 : index
      %c0_11 = arith.constant 0 : index
      %12 = vector.load %arg8[%c0_10, %c0_11] : memref<16x256xf32, #tpu.memory_space<vmem>>, vector<16x256xf32>
      %13 = arith.truncf %12 : vector<16x256xf32> to vector<16x256xbf16>
      %c0_12 = arith.constant 0 : index
      %c0_13 = arith.constant 0 : index
      %14 = vector.load %arg6[%c0_12, %c0_13] : memref<16x256xbf16, #tpu.memory_space<vmem>>, vector<16x256xbf16>
      tpu.vector_store %arg6[%c0_12, %c0_13], %13 {strides = array<i32>} : memref<16x256xbf16, #tpu.memory_space<vmem>>, vector<16x256xbf16>,
      %c0_i32_14 = arith.constant 0 : i32
      %15 = arith.cmpi eq, %arg1, %c0_i32_14 : i32
      %16 = arith.extui %15 : i1 to i32
      %c0_i32_15 = arith.constant 0 : i32
      %17 = arith.cmpi ne, %16, %c0_i32_15 : i32
      scf.if %17 {
        %cst_38 = arith.constant 0xFF800000 : f32
        %52 = vector.broadcast %cst_38 : f32 to vector<16x1xf32>
        %c0_39 = arith.constant 0 : index
        %c0_40 = arith.constant 0 : index
        %53 = vector.load %arg9[%c0_39, %c0_40] : memref<16x1xf32, #tpu.memory_space<vmem>>, vector<16x1xf32>
        tpu.vector_store %arg9[%c0_39, %c0_40], %52 {strides = array<i32>} : memref<16x1xf32, #tpu.memory_space<vmem>>, vector<16x1xf32>,
        %cst_41 = arith.constant 0.000000e+00 : f32
        %54 = vector.broadcast %cst_41 : f32 to vector<16x1xf32>
        %c0_42 = arith.constant 0 : index
        %c0_43 = arith.constant 0 : index
        %55 = vector.load %arg10[%c0_42, %c0_43] : memref<16x1xf32, #tpu.memory_space<vmem>>, vector<16x1xf32>
        tpu.vector_store %arg10[%c0_42, %c0_43], %54 {strides = array<i32>} : memref<16x1xf32, #tpu.memory_space<vmem>>, vector<16x1xf32>,
        %cst_44 = arith.constant 0.000000e+00 : f32
        %56 = vector.broadcast %cst_44 : f32 to vector<16x1xf32>
        %c0_45 = arith.constant 0 : index
        %c0_46 = arith.constant 0 : index
        %57 = vector.load %arg11[%c0_45, %c0_46] : memref<16x1xf32, #tpu.memory_space<vmem>>, vector<16x1xf32>
        tpu.vector_store %arg11[%c0_45, %c0_46], %56 {strides = array<i32>} : memref<16x1xf32, #tpu.memory_space<vmem>>, vector<16x1xf32>,
      } else {
      }
      %c0_16 = arith.constant 0 : index
      %c0_17 = arith.constant 0 : index
      %18 = vector.load %arg5[%c0_16, %c0_17] : memref<16x1xi32, #tpu.memory_space<vmem>>, vector<16x1xi32>
      %19 = tpu.iota {dimensions = array<i32: 1>} : vector<16x256xi32>
      %c256_i32 = arith.constant 256 : i32
      %20 = arith.muli %arg1, %c256_i32 : i32
      %21 = vector.broadcast %20 : i32 to vector<16x256xi32>
      %22 = arith.addi %19, %21 : vector<16x256xi32>
      %cst_18 = arith.constant dense<0xFF800000> : vector<16xf32>
      %23 = vector.multi_reduction <maximumf>, %12, %cst_18 [1] : vector<16x256xf32> to vector<16xf32>
      %24 = vector.shape_cast %23 : vector<16xf32> to vector<16x1xf32>
      %c0_19 = arith.constant 0 : index
      %c0_20 = arith.constant 0 : index
      %25 = vector.load %arg9[%c0_19, %c0_20] : memref<16x1xf32, #tpu.memory_space<vmem>>, vector<16x1xf32>
      %26 = arith.maximumf %25, %24 : vector<16x1xf32>
      %c0_21 = arith.constant 0 : index
      %c0_22 = arith.constant 0 : index
      %27 = vector.load %arg9[%c0_21, %c0_22] : memref<16x1xf32, #tpu.memory_space<vmem>>, vector<16x1xf32>
      %28 = arith.subf %27, %26 : vector<16x1xf32>
      %29 = math.exp %28 : vector<16x1xf32>
      %c0_23 = arith.constant 0 : index
      %c0_24 = arith.constant 0 : index
      %30 = vector.load %arg10[%c0_23, %c0_24] : memref<16x1xf32, #tpu.memory_space<vmem>>, vector<16x1xf32>
      %31 = arith.mulf %29, %30 : vector<16x1xf32>
      %32 = vector.broadcast %26 : vector<16x1xf32> to vector<16x256xf32>
      %33 = arith.subf %12, %32 : vector<16x256xf32>
      %34 = math.exp %33 : vector<16x256xf32>
      %cst_25 = arith.constant dense<0.000000e+00> : vector<16xf32>
      %35 = vector.multi_reduction <add>, %34, %cst_25 [1] : vector<16x256xf32> to vector<16xf32>
      %36 = vector.shape_cast %35 : vector<16xf32> to vector<16x1xf32>
      %37 = arith.addf %31, %36 : vector<16x1xf32>
      %c0_26 = arith.constant 0 : index
      %c0_27 = arith.constant 0 : index
      %38 = vector.load %arg10[%c0_26, %c0_27] : memref<16x1xf32, #tpu.memory_space<vmem>>, vector<16x1xf32>
      tpu.vector_store %arg10[%c0_26, %c0_27], %37 {strides = array<i32>} : memref<16x1xf32, #tpu.memory_space<vmem>>, vector<16x1xf32>,
      %c0_28 = arith.constant 0 : index
      %c0_29 = arith.constant 0 : index
      %39 = vector.load %arg9[%c0_28, %c0_29] : memref<16x1xf32, #tpu.memory_space<vmem>>, vector<16x1xf32>
      tpu.vector_store %arg9[%c0_28, %c0_29], %26 {strides = array<i32>} : memref<16x1xf32, #tpu.memory_space<vmem>>, vector<16x1xf32>,
      %c0_30 = arith.constant 0 : index
      %c0_31 = arith.constant 0 : index
      %40 = vector.load %arg11[%c0_30, %c0_31] : memref<16x1xf32, #tpu.memory_space<vmem>>, vector<16x1xf32>
      %41 = vector.broadcast %18 : vector<16x1xi32> to vector<16x256xi32>
      %42 = arith.cmpi eq, %22, %41 : vector<16x256xi32>
      %cst_32 = arith.constant 0.000000e+00 : f32
      %43 = vector.broadcast %cst_32 : f32 to vector<16x256xf32>
      %44 = arith.select %42, %12, %43 : vector<16x256xi1>, vector<16x256xf32>
      %cst_33 = arith.constant dense<0.000000e+00> : vector<16xf32>
      %45 = vector.multi_reduction <add>, %44, %cst_33 [1] : vector<16x256xf32> to vector<16xf32>
      %46 = vector.shape_cast %45 : vector<16xf32> to vector<16x1xf32>
      %47 = arith.addf %40, %46 : vector<16x1xf32>
      %c0_34 = arith.constant 0 : index
      %c0_35 = arith.constant 0 : index
      %48 = vector.load %arg11[%c0_34, %c0_35] : memref<16x1xf32, #tpu.memory_space<vmem>>, vector<16x1xf32>
      tpu.vector_store %arg11[%c0_34, %c0_35], %47 {strides = array<i32>} : memref<16x1xf32, #tpu.memory_space<vmem>>, vector<16x1xf32>,
      %c0_i32_36 = arith.constant 0 : i32
      %49 = arith.cmpi eq, %arg1, %c0_i32_36 : i32
      %50 = arith.extui %49 : i1 to i32
      %c0_i32_37 = arith.constant 0 : i32
      %51 = arith.cmpi ne, %50, %c0_i32_37 : i32
      scf.if %51 {
        %c0_38 = arith.constant 0 : index
        %c0_39 = arith.constant 0 : index
        %52 = vector.load %arg9[%c0_38, %c0_39] : memref<16x1xf32, #tpu.memory_space<vmem>>, vector<16x1xf32>
        %c0_40 = arith.constant 0 : index
        %c0_41 = arith.constant 0 : index
        %53 = vector.load %arg10[%c0_40, %c0_41] : memref<16x1xf32, #tpu.memory_space<vmem>>, vector<16x1xf32>
        %54 = math.log %53 : vector<16x1xf32>
        %55 = arith.addf %52, %54 : vector<16x1xf32>
        %c-100_i32 = arith.constant -100 : i32
        %56 = vector.broadcast %c-100_i32 : i32 to vector<16x1xi32>
        %57 = arith.cmpi ne, %18, %56 : vector<16x1xi32>
        %c0_42 = arith.constant 0 : index
        %c0_43 = arith.constant 0 : index
        %58 = vector.load %arg11[%c0_42, %c0_43] : memref<16x1xf32, #tpu.memory_space<vmem>>, vector<16x1xf32>
        %59 = arith.subf %55, %58 : vector<16x1xf32>
        %cst_44 = arith.constant 0.000000e+00 : f32
        %60 = vector.broadcast %cst_44 : f32 to vector<16x1xf32>
        %61 = arith.select %57, %59, %60 : vector<16x1xi1>, vector<16x1xf32>
        %c0_45 = arith.constant 0 : index
        %c0_46 = arith.constant 0 : index
        %62 = vector.load %arg7[%c0_45, %c0_46] : memref<16x1xf32, #tpu.memory_space<vmem>>, vector<16x1xf32>
        tpu.vector_store %arg7[%c0_45, %c0_46], %61 {strides = array<i32>} : memref<16x1xf32, #tpu.memory_space<vmem>>, vector<16x1xf32>,
      } else {
      }
    } else {
    }
    return
  }
  func.func @transform_0(%arg0: i32, %arg1: i32, %arg2: i32) -> (i32, i32) {
    %c0_i32 = arith.constant 0 : i32
    return %arg0, %arg2 : i32, i32
  }
  func.func @transform_1(%arg0: i32, %arg1: i32, %arg2: i32) -> (i32, i32) {
    %c0_i32 = arith.constant 0 : i32
    return %arg1, %arg2 : i32, i32
  }
  func.func @transform_2(%arg0: i32, %arg1: i32, %arg2: i32) -> (i32, i32) {
    %c0_i32 = arith.constant 0 : i32
    %c0_i32_0 = arith.constant 0 : i32
    return %arg0, %c0_i32 : i32, i32
  }
  func.func @transform_3(%arg0: i32, %arg1: i32, %arg2: i32) -> (i32, i32) {
    %c0_i32 = arith.constant 0 : i32
    return %arg0, %arg1 : i32, i32
  }
  func.func @transform_4(%arg0: i32, %arg1: i32, %arg2: i32) -> (i32, i32) {
    %c0_i32 = arith.constant 0 : i32
    %c0_i32_0 = arith.constant 0 : i32
    return %arg0, %c0_i32 : i32, i32
  }
}

</mosaic_0001>

<llo_original>
// kernel: llama_head_forward.1
$region0: #{llama_head_forward.1}
  #allocation0 [shape = 'u32[]', space=smem, size = 0x4, offset = 0x4, fixed_abs, tag = 'smem constant byte address 0x4 - core index']
  #allocation1 [shape = 'u32[72,128]{1,0:T(1,128)}', space=vmem, size = 0x9000, scoped, tag = 'internal scratch']
  #allocation2 [shape = 'f32[16,256]{1,0:T(8,128)}', space=vmem, size = 0x4000, scoped, tag = 'scratch operand']
  #allocation3 [shape = 'f32[16,1]{1,0:T(8,128)}', space=vmem, size = 0x2000, scoped, tag = 'scratch operand']
  #allocation4 [shape = 'f32[16,1]{1,0:T(8,128)}', space=vmem, size = 0x2000, scoped, tag = 'scratch operand']
  #allocation5 [shape = 'f32[16,1]{1,0:T(8,128)}', space=vmem, size = 0x2000, scoped, tag = 'scratch operand']
  %s0 = inlined_call_operand.vmem [shape: bf16[16,128], index: 0, kind: input, shape index: {}]
  %s1 = inlined_call_operand.hbm [shape: bf16[256,128], index: 1, kind: input, shape index: {}]
  %s2 = inlined_call_operand.vmem [shape: s32[16,1], index: 2, kind: input, shape index: {}]
  %s3 = inlined_call_operand.hbm [shape: bf16[16,256], index: 3, kind: output, shape index: {0}]
  %s4 = inlined_call_operand.vmem [shape: f32[16,1], index: 4, kind: output, shape index: {1}]
  %5 = xla_tuple %s3, %s4
  %s6 = sld [smem:[#allocation0]]
  $region50: #{llama_head_forward.1} parent=0
    _
  %s8 = ssub.s32 1, %s6
  %s9 = scalar_select 0, %s8, %s6
  $region1: #{llama_head_forward.1} parent=0
    #allocation6 [shape = 'u8[65536]{0}', space=vmem, size = 0x10000, scoped, tag = 'input window, operand 1, single buffered']
    #allocation7 [shape = 's32[1]{0}', space=sflag, size = 0x4, scoped, tag = 'scoped memory for llama_head_forward.1']
    #allocation8 [shape = 's32[1]{0}', space=sflag, size = 0x4, scoped, tag = 'scoped memory for llama_head_forward.1']
    #allocation9 [shape = 'u8[8192]{0}', space=vmem, size = 0x2000, scoped, tag = 'output window, operand 0, single buffered']
    %10 = vsyncpa [#allocation7], 0
    %11 = vsyncpa [#allocation8], 0
    // Predicated region
    $region2: #{llama_head_forward.1} parent=1 // pred_check
      _
    $region3: #{llama_head_forward.1} parent=1 // pred_check_branch
      %13 = sbr.rel (0) target = $region5
    $region4: #{llama_head_forward.1} parent=1 // pred_region
      _
    $region5: #{llama_head_forward.1} parent=1 // pred_fallthru
      _
    // Predicated region
    $region6: #{llama_head_forward.1} parent=1 // pred_check
      _
    $region7: #{llama_head_forward.1} parent=1 // pred_check_branch
      %15 = sbr.rel (0) target = $region9
    $region8: #{llama_head_forward.1} parent=1 // pred_region
      %17 = vsyncadd [#allocation7], 0
      %s18 = sshll.u32 %s1, 4
      %s19 = int_to_ptr.hbm [resolvable:$true] %s18
      %s20 = sshll.u32 [#allocation6], 4
      %s21 = int_to_ptr.vmem [resolvable:$true] %s20
      %26 = dma.hbm_to_vmem [thread:$0]  %s19, 2048, %s21, [#allocation7], 64, 64, 4
    $region9: #{llama_head_forward.1} parent=1 // pred_fallthru
      _
    // Predicated region
    $region10: #{llama_head_forward.1} parent=1 // pred_check
      _
    $region11: #{llama_head_forward.1} parent=1 // pred_check_branch
      %28 = sbr.rel (0) target = $region13
    $region12: #{llama_head_forward.1} parent=1 // pred_region
      _
    $region13: #{llama_head_forward.1} parent=1 // pred_fallthru
      _
    // Predicated region
    $region14: #{llama_head_forward.1} parent=1 // pred_check
      _
    $region15: #{llama_head_forward.1} parent=1 // pred_check_branch
      %30 = sbr.rel (0) target = $region17
    $region16: #{llama_head_forward.1} parent=1 // pred_region
      %32 = dma.done [#allocation7], 2048
    $region17: #{llama_head_forward.1} parent=1 // pred_fallthru
      _
    %p33 = scmp.eq.s32.totalorder 0, 0
    // Predicated region
    $region18: #{llama_head_forward.1} parent=1 // pred_check
      %p34 = pneg %p33
    $region19: #{llama_head_forward.1} parent=1 // pred_check_branch
      %36 = sbr.rel (%p34) target = $region21
    $region20: #{llama_head_forward.1} parent=1 // pred_region
      %37 = vst [vmem:[#allocation2] sm:$0xff] 0.0
      %38 = vst [vmem:[#allocation2 + $0x8] sm:$0xff] 0.0
      %39 = vst [vmem:[#allocation2 + $0x10] sm:$0xff] 0.0
      %40 = vst [vmem:[#allocation2 + $0x18] sm:$0xff] 0.0
    $region21: #{llama_head_forward.1} parent=1 // pred_fallthru
      _
    %v41 = vld [vmem:[#allocation2] sm:$0xff]
    %v42 = vld [vmem:[#allocation2 + $0x8] sm:$0xff]
    %v43 = vld [vmem:[#allocation2 + $0x10] sm:$0xff]
    %v44 = vld [vmem:[#allocation2 + $0x18] sm:$0xff]
    %v45 = vld [vmem:[%s0] sm:$0xf]
    %v46 = vld [vmem:[%s0 + $0x4] sm:$0xf]
    %v47 = vld [vmem:[#allocation6] sm:$0xf]
    %v48 = vld [vmem:[#allocation6 + $0x4] sm:$0xf]
    %v49 = vld [vmem:[#allocation6 + $0x8] sm:$0xf]
    %v50 = vld [vmem:[#allocation6 + $0xc] sm:$0xf]
    %v51 = vld [vmem:[#allocation6 + $0x10] sm:$0xf]
    %v52 = vld [vmem:[#allocation6 + $0x14] sm:$0xf]
    %v53 = vld [vmem:[#allocation6 + $0x18] sm:$0xf]
    %v54 = vld [vmem:[#allocation6 + $0x1c] sm:$0xf]
    %v55 = vld [vmem:[#allocation6 + $0x20] sm:$0xf]
    %v56 = vld [vmem:[#allocation6 + $0x24] sm:$0xf]
    %v57 = vld [vmem:[#allocation6 + $0x28] sm:$0xf]
    %v58 = vld [vmem:[#allocation6 + $0x2c] sm:$0xf]
    %v59 = vld [vmem:[#allocation6 + $0x30] sm:$0xf]
    %v60 = vld [vmem:[#allocation6 + $0x34] sm:$0xf]
    %v61 = vld [vmem:[#allocation6 + $0x38] sm:$0xf]
    %v62 = vld [vmem:[#allocation6 + $0x3c] sm:$0xf]
    %v63 = vld [vmem:[#allocation6 + $0x40] sm:$0xf]
    %v64 = vld [vmem:[#allocation6 + $0x44] sm:$0xf]
    %v65 = vld [vmem:[#allocation6 + $0x48] sm:$0xf]
    %v66 = vld [vmem:[#allocation6 + $0x4c] sm:$0xf]
    %v67 = vld [vmem:[#allocation6 + $0x50] sm:$0xf]
    %v68 = vld [vmem:[#allocation6 + $0x54] sm:$0xf]
    %v69 = vld [vmem:[#allocation6 + $0x58] sm:$0xf]
    %v70 = vld [vmem:[#allocation6 + $0x5c] sm:$0xf]
    %v71 = vld [vmem:[#allocation6 + $0x60] sm:$0xf]
    %v72 = vld [vmem:[#allocation6 + $0x64] sm:$0xf]
    %v73 = vld [vmem:[#allocation6 + $0x68] sm:$0xf]
    %v74 = vld [vmem:[#allocation6 + $0x6c] sm:$0xf]
    %v75 = vld [vmem:[#allocation6 + $0x70] sm:$0xf]
    %v76 = vld [vmem:[#allocation6 + $0x74] sm:$0xf]
    %v77 = vld [vmem:[#allocation6 + $0x78] sm:$0xf]
    %v78 = vld [vmem:[#allocation6 + $0x7c] sm:$0xf]
    %v81 = vunpack.c.l.b16 %v45
    %v82 = vunpack.c.l.b16 %v46
    %v83 = vpack.c.b16 %v82, %v81
    %v117 = vunpack.c.l.b16 %v47
    %v118 = vunpack.c.l.b16 %v48
    %v119 = vunpack.c.l.b16 %v49
    %v120 = vunpack.c.l.b16 %v50
    %v121 = vunpack.c.l.b16 %v51
    %v122 = vunpack.c.l.b16 %v52
    %v123 = vunpack.c.l.b16 %v53
    %v124 = vunpack.c.l.b16 %v54
    %v125 = vunpack.c.l.b16 %v55
    %v126 = vunpack.c.l.b16 %v56
    %v127 = vunpack.c.l.b16 %v57
    %v128 = vunpack.c.l.b16 %v58
    %v129 = vunpack.c.l.b16 %v59
    %v130 = vunpack.c.l.b16 %v60
    %v131 = vunpack.c.l.b16 %v61
    %v132 = vunpack.c.l.b16 %v62
    %v133 = vunpack.c.l.b16 %v63
    %v134 = vunpack.c.l.b16 %v64
    %v135 = vunpack.c.l.b16 %v65
    %v136 = vunpack.c.l.b16 %v66
    %v137 = vunpack.c.l.b16 %v67
    %v138 = vunpack.c.l.b16 %v68
    %v139 = vunpack.c.l.b16 %v69
    %v140 = vunpack.c.l.b16 %v70
    %v141 = vunpack.c.l.b16 %v71
    %v142 = vunpack.c.l.b16 %v72
    %v143 = vunpack.c.l.b16 %v73
    %v144 = vunpack.c.l.b16 %v74
    %v145 = vunpack.c.l.b16 %v75
    %v146 = vunpack.c.l.b16 %v76
    %v147 = vunpack.c.l.b16 %v77
    %v148 = vunpack.c.l.b16 %v78
    %v149 = vpack.c.b16 %v118, %v117
    %v150 = vpack.c.b16 %v120, %v119
    %v151 = vpack.c.b16 %v122, %v121
    %v152 = vpack.c.b16 %v124, %v123
    %v153 = vpack.c.b16 %v126, %v125
    %v154 = vpack.c.b16 %v128, %v127
    %v155 = vpack.c.b16 %v130, %v129
    %v156 = vpack.c.b16 %v132, %v131
    %v157 = vpack.c.b16 %v134, %v133
    %v158 = vpack.c.b16 %v136, %v135
    %v159 = vpack.c.b16 %v138, %v137
    %v160 = vpack.c.b16 %v140, %v139
    %v161 = vpack.c.b16 %v142, %v141
    %v162 = vpack.c.b16 %v144, %v143
    %v163 = vpack.c.b16 %v146, %v145
    %v164 = vpack.c.b16 %v148, %v147
    %181 = vmatpush.bf16.xpose.msra.mxu0 %v156
    %182 = vmatpush.bf16.xpose.msra.mxu0 %v155
    %183 = vmatpush.bf16.xpose.msra.mxu0 %v154
    %184 = vmatpush.bf16.xpose.msra.mxu0 %v153
    %185 = vmatpush.bf16.xpose.msra.mxu0 %v152
    %186 = vmatpush.bf16.xpose.msra.mxu0 %v151
    %187 = vmatpush.bf16.xpose.msra.mxu0 %v150
    %188 = vmatpush.bf16.xpose.msra.mxu0 %v149
    %189 = vmatmul.bf16.gmra.mxu0 %v83
    %v190 = vpop.f32.mrf.mxu0
    %v191 = vadd.f32 0.0, %v190
    %v192 = vpop.f32.mrf.mxu0
    %v193 = vadd.f32 0.0, %v192
    %194 = vdwg.mxu0
    %195 = vmatpush.bf16.xpose.msra.mxu0 %v164
    %196 = vmatpush.bf16.xpose.msra.mxu0 %v163
    %197 = vmatpush.bf16.xpose.msra.mxu0 %v162
    %198 = vmatpush.bf16.xpose.msra.mxu0 %v161
    %199 = vmatpush.bf16.xpose.msra.mxu0 %v160
    %200 = vmatpush.bf16.xpose.msra.mxu0 %v159
    %201 = vmatpush.bf16.xpose.msra.mxu0 %v158
    %202 = vmatpush.bf16.xpose.msra.mxu0 %v157
    %203 = vmatmul.bf16.gmra.mxu0 %v83
    %v204 = vpop.f32.mrf.mxu0
    %v205 = vadd.f32 0.0, %v204
    %v206 = vpop.f32.mrf.mxu0
    %v207 = vadd.f32 0.0, %v206
    %208 = vdwg.mxu0
    %v209 = vadd.f32 %v41, %v191
    %v210 = vadd.f32 %v42, %v205
    %v211 = vadd.f32 %v43, %v193
    %v212 = vadd.f32 %v44, %v207
    %213 = vst [vmem:[#allocation2] sm:$0xff] %v209
    %214 = vst [vmem:[#allocation2 + $0x8] sm:$0xff] %v210
    %215 = vst [vmem:[#allocation2 + $0x10] sm:$0xff] %v211
    %216 = vst [vmem:[#allocation2 + $0x18] sm:$0xff] %v212
    // Predicated region
    $region22: #{llama_head_forward.1} parent=1 // pred_check
      %p217 = pneg %p33
    $region23: #{llama_head_forward.1} parent=1 // pred_check_branch
      %219 = sbr.rel (%p217) target = $region25
    $region24: #{llama_head_forward.1} parent=1 // pred_region
      %v220 = vld [vmem:[#allocation2] sm:$0xff]
      %v221 = vld [vmem:[#allocation2 + $0x8] sm:$0xff]
      %v222 = vld [vmem:[#allocation2 + $0x10] sm:$0xff]
      %v223 = vld [vmem:[#allocation2 + $0x18] sm:$0xff]
      %v224 = vpack.c.bf16 %v221, %v220
      %v225 = vpack.c.bf16 %v223, %v222
      %226 = vst [vmem:[#allocation9] sm:$0xff] %v224
      %227 = vst [vmem:[#allocation9 + $0x8] sm:$0xff] %v225
      %p228 = scmp.eq.s32.totalorder 0, 0
      // Predicated region
      $region26: #{llama_head_forward.1} parent=24 // pred_check
        %p229 = pneg %p228
      $region27: #{llama_head_forward.1} parent=24 // pred_check_branch
        %231 = sbr.rel (%p229) target = $region29
      $region28: #{llama_head_forward.1} parent=24 // pred_region
        %vm232 = vcmask 7168
        %233 = vst.msk [vmem:[#allocation3] sm:$0xff] %vm232, -inf
        %234 = vst.msk [vmem:[#allocation3 + $0x8] sm:$0xff] %vm232, -inf
        %235 = vst.msk [vmem:[#allocation4] sm:$0xff] %vm232, 0.0
        %236 = vst.msk [vmem:[#allocation4 + $0x8] sm:$0xff] %vm232, 0.0
        %237 = vst.msk [vmem:[#allocation5] sm:$0xff] %vm232, 0.0
        %238 = vst.msk [vmem:[#allocation5 + $0x8] sm:$0xff] %vm232, 0.0
      $region29: #{llama_head_forward.1} parent=24 // pred_fallthru
        _
      %v239 = vld [vmem:[%s2] sm:$0xff]
      %v240 = vld [vmem:[%s2 + $0x8] sm:$0xff]
      %v241 = vlaneseq
      %v242 = vand.u32 %v241, 127
      %v243 = vadd.s32 %v242, 128
      %s244 = smul.u32 0, 256
      %v245 = vstv %s244
      %v246 = vadd.s32 %v242, %v245
      %v247 = vadd.s32 %v243, %v245
      %v248 = vmax.f32 %v220, %v221
      %249 = vmax.xlane.f32.xlu0 %v248
      %v250 = vpop.xlane.xlu0 %249
      %v251 = vmax.f32 %v222, %v223
      %252 = vmax.xlane.f32.xlu0 %v251
      %v253 = vpop.xlane.xlu0 %252
      %v254 = vld [vmem:[#allocation3] sm:$0xff]
      %v255 = vld [vmem:[#allocation3 + $0x8] sm:$0xff]
      %v256 = vmax.f32 %v254, %v250
      %v257 = vmax.f32 %v255, %v253
      %v258 = vsub.f32 %v254, %v256
      %v259 = vsub.f32 %v255, %v257
      %v260 = vmul.f32 %v258, 1.442695
      %v261 = vpow.pop %v260
      %v262 = vmul.f32 %v259, 1.442695
      %v263 = vpow.pop %v262
      %v264 = vld [vmem:[#allocation4] sm:$0xff]
      %v265 = vld [vmem:[#allocation4 + $0x8] sm:$0xff]
      %v266 = vmul.f32 %v261, %v264
      %v267 = vmul.f32 %v263, %v265
      %269 = vset.pattern.permute.xlu0 0
      %270 = vperm.xlu0 %269, %v256
      %v271 = vpop.permute.xlu0 %270
      %274 = vset.pattern.permute.xlu0 0
      %275 = vperm.xlu0 %274, %v257
      %v276 = vpop.permute.xlu0 %275
      %v278 = vsub.f32 %v220, %v271
      %v279 = vsub.f32 %v221, %v271
      %v280 = vsub.f32 %v222, %v276
      %v281 = vsub.f32 %v223, %v276
      %v282 = vmul.f32 %v278, 1.442695
      %v283 = vpow.pop %v282
      %v284 = vmul.f32 %v279, 1.442695
      %v285 = vpow.pop %v284
      %v286 = vmul.f32 %v280, 1.442695
      %v287 = vpow.pop %v286
      %v288 = vmul.f32 %v281, 1.442695
      %v289 = vpow.pop %v288
      %v290 = vadd.f32 %v283, %v285
      %291 = vadd.xlane.f32.xlu0 %v290
      %v292 = vpop.xlane.xlu0 %291
      %v293 = vadd.f32 %v287, %v289
      %294 = vadd.xlane.f32.xlu0 %v293
      %v295 = vpop.xlane.xlu0 %294
      %v296 = vadd.f32 %v266, %v292
      %v297 = vadd.f32 %v267, %v295
      %vm298 = vcmask 7168
      %299 = vst.msk [vmem:[#allocation4] sm:$0xff] %vm298, %v296
      %300 = vst.msk [vmem:[#allocation4 + $0x8] sm:$0xff] %vm298, %v297
      %301 = vst.msk [vmem:[#allocation3] sm:$0xff] %vm298, %v256
      %302 = vst.msk [vmem:[#allocation3 + $0x8] sm:$0xff] %vm298, %v257
      %v303 = vld [vmem:[#allocation5] sm:$0xff]
      %v304 = vld [vmem:[#allocation5 + $0x8] sm:$0xff]
      %305 = vset.pattern.permute.xlu0 0
      %306 = vperm.xlu0 %305, %v239
      %v307 = vpop.permute.xlu0 %306
      %308 = vset.pattern.permute.xlu0 0
      %309 = vperm.xlu0 %308, %v240
      %v310 = vpop.permute.xlu0 %309
      %vm311 = vcmp.eq.s32.totalorder %v246, %v307
      %vm312 = vcmp.eq.s32.totalorder %v247, %v307
      %vm313 = vcmp.eq.s32.totalorder %v246, %v310
      %vm314 = vcmp.eq.s32.totalorder %v247, %v310
      %v315 = vsel %vm311, %v220, 0.0
      %v316 = vsel %vm312, %v221, 0.0
      %v317 = vsel %vm313, %v222, 0.0
      %v318 = vsel %vm314, %v223, 0.0
      %v319 = vadd.f32 %v315, %v316
      %320 = vadd.xlane.f32.xlu0 %v319
      %v321 = vpop.xlane.xlu0 %320
      %v322 = vadd.f32 %v317, %v318
      %323 = vadd.xlane.f32.xlu0 %v322
      %v324 = vpop.xlane.xlu0 %323
      %v325 = vadd.f32 %v303, %v321
      %v326 = vadd.f32 %v304, %v324
      %327 = vst.msk [vmem:[#allocation5] sm:$0xff] %vm298, %v325
      %328 = vst.msk [vmem:[#allocation5 + $0x8] sm:$0xff] %vm298, %v326
      // Predicated region
      $region30: #{llama_head_forward.1} parent=24 // pred_check
        %p329 = pneg %p228
      $region31: #{llama_head_forward.1} parent=24 // pred_check_branch
        %331 = sbr.rel (%p329) target = $region33
      $region32: #{llama_head_forward.1} parent=24 // pred_region
        %v332 = vld [vmem:[#allocation3] sm:$0xff]
        %v333 = vld [vmem:[#allocation3 + $0x8] sm:$0xff]
        %v334 = vld [vmem:[#allocation4] sm:$0xff]
        %v335 = vld [vmem:[#allocation4 + $0x8] sm:$0xff]
        %v336 = vlog2.pop %v334
        %v337 = vmul.f32 %v336, 0.6931472
        %v338 = vlog2.pop %v335
        %v339 = vmul.f32 %v338, 0.6931472
        %v340 = vadd.f32 %v332, %v337
        %v341 = vadd.f32 %v333, %v339
        %vm342 = vcmp.ne.s32.totalorder %v239, 4294967196
        %vm343 = vcmp.ne.s32.totalorder %v240, 4294967196
        %v344 = vld [vmem:[#allocation5] sm:$0xff]
        %v345 = vld [vmem:[#allocation5 + $0x8] sm:$0xff]
        %v346 = vsub.f32 %v340, %v344
        %v347 = vsub.f32 %v341, %v345
        %v348 = vsel %vm342, %v346, 0.0
        %v349 = vsel %vm343, %v347, 0.0
        %350 = vst.msk [vmem:[%s4] sm:$0xff] %vm298, %v348
        %351 = vst.msk [vmem:[%s4 + $0x8] sm:$0xff] %vm298, %v349
      $region33: #{llama_head_forward.1} parent=24 // pred_fallthru
        _
    $region25: #{llama_head_forward.1} parent=1 // pred_fallthru
      _
    // Predicated region
    $region34: #{llama_head_forward.1} parent=1 // pred_check
      _
    $region35: #{llama_head_forward.1} parent=1 // pred_check_branch
      %353 = sbr.rel (0) target = $region37
    $region36: #{llama_head_forward.1} parent=1 // pred_region
      %355 = vsyncadd [#allocation8], 0
      %s356 = sshll.u32 [#allocation9], 4
      %s357 = int_to_ptr.vmem [resolvable:$true] %s356
      %s358 = sshll.u32 %s3, 4
      %s359 = int_to_ptr.hbm [resolvable:$true] %s358
      %364 = dma.vmem_to_hbm [thread:$0]  %s357, 256, %s359, [#allocation8], 128, 128, 8
    $region37: #{llama_head_forward.1} parent=1 // pred_fallthru
      _
    // Predicated region
    $region38: #{llama_head_forward.1} parent=1 // pred_check
      _
    $region39: #{llama_head_forward.1} parent=1 // pred_check_branch
      %366 = sbr.rel (0) target = $region41
    $region40: #{llama_head_forward.1} parent=1 // pred_region
      _
    $region41: #{llama_head_forward.1} parent=1 // pred_fallthru
      _
    // Predicated region
    $region42: #{llama_head_forward.1} parent=1 // pred_check
      _
    $region43: #{llama_head_forward.1} parent=1 // pred_check_branch
      %368 = sbr.rel (0) target = $region45
    $region44: #{llama_head_forward.1} parent=1 // pred_region
      %370 = dma.done [#allocation8], 256
    $region45: #{llama_head_forward.1} parent=1 // pred_fallthru
      _
    // Predicated region
    $region46: #{llama_head_forward.1} parent=1 // pred_check
      _
    $region47: #{llama_head_forward.1} parent=1 // pred_check_branch
      %372 = sbr.rel (0) target = $region49
    $region48: #{llama_head_forward.1} parent=1 // pred_region
      _
    $region49: #{llama_head_forward.1} parent=1 // pred_fallthru
      _
    %373 = vsyncpa [#allocation7], 1
    %374 = vsyncpa [#allocation8], 1

</llo_original>
